<compile_context>
chip_gen: v7x
topology: tpu7x:2x2x1
jax: 0.10.0
libtpu: 0.0.40
codegen_flags: <defaults>
</compile_context>

<pallas_src>
import functools

import jax
import jax.numpy as jnp
from jax import lax
from jax.experimental import pallas as pl
from jax.experimental.pallas import tpu as pltpu


def _shallownet_kernel(x_ref, w_ref, b_ref, pool_ref, fcw_ref, fcb_ref, out_ref,
                       *, n_valid_t, len_filter, w_out):
    Bb, C, Tp = x_ref.shape          # batch block, electrodes, padded time
    T = n_valid_t
    K = len_filter
    S = w_ref.shape[0]

    # im2col for the whole batch block with batch packed on the lane axis:
    #   cols[k*C + c, b*T + t] = x[b, c, t + k]           -> (K*C, Bb*T)
    cols_per_b = []
    for b in range(Bb):                                   # tiny, static unroll
        xb = x_ref[b]                                     # (C, Tp)
        cols_per_b.append(
            jnp.concatenate([xb[:, k:k + T] for k in range(K)], axis=0))
    cols = jnp.concatenate(cols_per_b, axis=1)            # (K*C, Bb*T)

    # fused conv_time + bn_time + conv_space + bn_space: ONE MXU matmul
    z = jnp.dot(w_ref[...], cols, preferred_element_type=jnp.float32)  # (S, Bb*T)
    z = z + b_ref[...]                                    # folded BN biases
    z = z * z                                             # torch.pow(out, 2)

    # AvgPool along time as a matmul with a block-diagonal averaging matrix
    pooled = jnp.dot(z, pool_ref[...],
                     preferred_element_type=jnp.float32)  # (S, Bb*w_out)
    feat = jnp.log(jnp.maximum(pooled, 1e-6))             # log(clamp(., 1e-6))
    # TODO(synk): Dropout(0.5) is identity in this eval-mode forward.

    # classifier: regroup to per-sample rows in torch flatten order
    # (space-filter-major, then pooled time), then one matmul for the block.
    rows = []
    for b in range(Bb):
        rows.append(jnp.concatenate(
            [feat[s:s + 1, b * w_out:(b + 1) * w_out] for s in range(S)],
            axis=1))                                      # (1, S*w_out)
    feat_flat = jnp.concatenate(rows, axis=0)             # (Bb, S*w_out)
    out_ref[...] = (jnp.dot(feat_flat, fcw_ref[...],
                            preferred_element_type=jnp.float32) + fcb_ref[...])


def max_norm(w, max_value, axes):
    norms = jnp.sqrt(jnp.sum(w * w, axis=axes, keepdims=True))
    desired = jnp.clip(norms, 0.0, max_value)
    return w * (desired / (1e-7 + norms))


def init_params(key, n_chan, n_sample, n_class, n_time_filter, len_time_filter,
                n_space_filter, pool_size, pool_stride):
    w_out = (n_sample - pool_size) // pool_stride + 1
    ks = jax.random.split(key, 12)
    return dict(
        w_time=0.3 * jax.random.normal(ks[0], (n_time_filter, len_time_filter), jnp.float32),
        w_space=0.3 * jax.random.normal(ks[1], (n_space_filter, n_time_filter, n_chan), jnp.float32),
        gamma_t=1.0 + 0.1 * jax.random.normal(ks[2], (n_time_filter,), jnp.float32),
        beta_t=0.1 * jax.random.normal(ks[3], (n_time_filter,), jnp.float32),
        mean_t=0.1 * jax.random.normal(ks[4], (n_time_filter,), jnp.float32),
        var_t=jax.random.uniform(ks[5], (n_time_filter,), jnp.float32, 0.5, 1.5),
        gamma_s=1.0 + 0.1 * jax.random.normal(ks[6], (n_space_filter,), jnp.float32),
        beta_s=0.1 * jax.random.normal(ks[7], (n_space_filter,), jnp.float32),
        mean_s=0.1 * jax.random.normal(ks[8], (n_space_filter,), jnp.float32),
        var_s=jax.random.uniform(ks[9], (n_space_filter,), jnp.float32, 0.5, 1.5),
        fc_w=0.1 * jax.random.normal(ks[10], (n_class, n_space_filter * w_out), jnp.float32),
        fc_b=0.1 * jax.random.normal(ks[11], (n_class,), jnp.float32),
    )


def shallow_convnet_forward(x, params, *, pool_size, pool_stride):
    B, C, T = x.shape
    F, K = params['w_time'].shape
    S = params['w_space'].shape[0]
    n_class = params['fc_b'].shape[0]
    pad = (K - 1) // 2                  # Conv2d padding=(0, (K-1)//2) in torch
    eps = 1e-5
    w_out = (T - pool_size) // pool_stride + 1

    # max-norm weight constraints (applied inside forward() in the module)
    w_time = max_norm(params['w_time'], 1.0, (1,))            # (F, K)
    w_space = max_norm(params['w_space'], 1.0, (1, 2))        # (S, F, C)
    fc_w = max_norm(params['fc_w'], 0.5, (1,))                # (n_class, S*w_out)

    # fold eval-mode batchnorm into per-channel scale / bias
    scale_t = params['gamma_t'] / jnp.sqrt(params['var_t'] + eps)
    bias_t = params['beta_t'] - params['mean_t'] * scale_t
    scale_s = params['gamma_s'] / jnp.sqrt(params['var_s'] + eps)
    bias_s = params['beta_s'] - params['mean_s'] * scale_s

    # algebraic fusion: conv_time∘bn_time∘conv_space∘bn_space ==
    #   z[s, t] = sum_{k,c} w_comb[s, k*C + c] * x_pad[c, t + k] + b_comb[s]
    w_kc = jnp.einsum('sfc,f,fk->skc', w_space, scale_t, w_time)      # (S, K, C)
    w_comb = (scale_s[:, None, None] * w_kc).reshape(S, K * C)
    b_comb = (scale_s * jnp.einsum('sfc,f->s', w_space, bias_t)
              + bias_s).reshape(S, 1)

    # batch block packed on the lane axis: b_blk*T lanes per MXU pass
    b_blk = B                       # toy B=2, T=64 -> exactly 128 dense lanes
    nb = B // b_blk

    # block-diagonal averaging matrix for AvgPool2d((1, pool), stride)
    t_idx = jnp.arange(T)[:, None]
    j_idx = jnp.arange(w_out)[None, :]
    win = (t_idx >= j_idx * pool_stride) & (t_idx < j_idx * pool_stride + pool_size)
    pool_one = win.astype(jnp.float32) / float(pool_size)             # (T, w_out)
    pool_mat = jnp.kron(jnp.eye(b_blk, dtype=jnp.float32), pool_one)  # (b_blk*T, b_blk*w_out)

    fcw_t = fc_w.T                                 # (S*w_out, n_class), row = s*w_out + j
    fcb = params['fc_b'].reshape(1, n_class)

    xp = jnp.pad(x.astype(jnp.float32), ((0, 0), (0, 0), (pad, pad)))
    Tp = T + 2 * pad
    x_grp = xp.reshape(nb, b_blk, C, Tp)

    kernel = functools.partial(_shallownet_kernel, n_valid_t=T, len_filter=K,
                               w_out=w_out)
    out = pl.pallas_call(
        kernel,
        out_shape=jax.ShapeDtypeStruct((nb, b_blk, n_class), jnp.float32),
        grid=(nb,),
        in_specs=[
            pl.BlockSpec((None, b_blk, C, Tp), lambda i: (i, 0, 0, 0)),
            pl.BlockSpec((S, K * C), lambda i: (0, 0)),
            pl.BlockSpec((S, 1), lambda i: (0, 0)),
            pl.BlockSpec((b_blk * T, b_blk * w_out), lambda i: (0, 0)),
            pl.BlockSpec((S * w_out, n_class), lambda i: (0, 0)),
            pl.BlockSpec((1, n_class), lambda i: (0, 0)),
        ],
        out_specs=pl.BlockSpec((None, b_blk, n_class), lambda i: (i, 0, 0)),
        compiler_params=pltpu.CompilerParams(
            dimension_semantics=("parallel",)),   # megacore batch sharding (v7x)
    )(x_grp, w_comb, b_comb, pool_mat, fcw_t, fcb)
    return out.reshape(B, n_class)


def reference_forward(x, params, *, pool_size, pool_stride):
    # pure-JAX mirror of ShallowConvNetv1.forward (eval mode), HIGHEST precision
    F, K = params['w_time'].shape
    S, _, C = params['w_space'].shape
    B, _, T = x.shape
    pad = (K - 1) // 2
    eps = 1e-5
    w_time = max_norm(params['w_time'], 1.0, (1,))
    w_space = max_norm(params['w_space'], 1.0, (1, 2))
    fc_w = max_norm(params['fc_w'], 0.5, (1,))
    xp = jnp.pad(x.astype(jnp.float32), ((0, 0), (0, 0), (pad, pad)))
    cols = jnp.stack([xp[:, :, k:k + T] for k in range(K)], axis=-1)  # (B,C,T,K)
    y = jnp.einsum('bctk,fk->bfct', cols, w_time, precision=lax.Precision.HIGHEST)
    y = (y - params['mean_t'][None, :, None, None]) \
        / jnp.sqrt(params['var_t'] + eps)[None, :, None, None]
    y = y * params['gamma_t'][None, :, None, None] + params['beta_t'][None, :, None, None]
    z = jnp.einsum('sfc,bfct->bst', w_space, y, precision=lax.Precision.HIGHEST)
    z = (z - params['mean_s'][None, :, None]) / jnp.sqrt(params['var_s'] + eps)[None, :, None]
    z = z * params['gamma_s'][None, :, None] + params['beta_s'][None, :, None]
    z = z * z
    w_out = (T - pool_size) // pool_stride + 1
    pooled = jnp.stack(
        [jnp.mean(z[:, :, j * pool_stride:j * pool_stride + pool_size], axis=2)
         for j in range(w_out)], axis=2)
    feat = jnp.log(jnp.maximum(pooled, 1e-6))
    flat = feat.reshape(B, -1)
    return flat @ fc_w.T + params['fc_b'][None, :]


if __name__ == "__main__":
    n_chan, n_sample, n_class = 4, 64, 3
    n_time_filter, len_time_filter = 8, 7
    n_space_filter, pool_size, pool_stride = 8, 8, 4
    batch = 2

    key = jax.random.PRNGKey(0)
    kx, kp = jax.random.split(key)
    x = jax.random.normal(kx, (batch, n_chan, n_sample), jnp.float32)
    params = init_params(kp, n_chan, n_sample, n_class, n_time_filter,
                         len_time_filter, n_space_filter, pool_size, pool_stride)

    out = shallow_convnet_forward(x, params, pool_size=pool_size,
                                  pool_stride=pool_stride)
    out = jax.block_until_ready(out)

    ref = reference_forward(x, params, pool_size=pool_size,
                            pool_stride=pool_stride)
    assert out.shape == (batch, n_class)
    assert jnp.allclose(out, ref, rtol=2e-2, atol=2e-2), (out, ref)
    print("KERNEL_OK")
</pallas_src>

<mosaic_0001>
module attributes {stable_mosaic.version = 11 : i64} {
  func.func @_shallownet_kernel(%arg0: i32, %arg1: memref<1x2x4x70xf32, #tpu.memory_space<vmem>>, %arg2: memref<8x28xf32, #tpu.memory_space<vmem>>, %arg3: memref<8x1xf32, #tpu.memory_space<vmem>>, %arg4: memref<128x30xf32, #tpu.memory_space<vmem>>, %arg5: memref<120x3xf32, #tpu.memory_space<vmem>>, %arg6: memref<1x3xf32, #tpu.memory_space<vmem>>, %arg7: memref<1x2x3xf32, #tpu.memory_space<vmem>>) attributes {dimension_semantics = [#tpu.dimension_semantics<parallel>], iteration_bounds = array<i64: 1>, scalar_prefetch = 0 : i64, scratch_operands = 0 : i64, tpu.core_type = #tpu.core_type<tc>, window_params = [{transform_indices = @transform_0, window_bounds = array<i64: 1, 2, 4, 70>}, {pipeline_mode = #tpu.pipeline_mode<synchronous>, transform_indices = @transform_1, window_bounds = array<i64: 8, 28>}, {pipeline_mode = #tpu.pipeline_mode<synchronous>, transform_indices = @transform_2, window_bounds = array<i64: 8, 1>}, {pipeline_mode = #tpu.pipeline_mode<synchronous>, transform_indices = @transform_3, window_bounds = array<i64: 128, 30>}, {pipeline_mode = #tpu.pipeline_mode<synchronous>, transform_indices = @transform_4, window_bounds = array<i64: 120, 3>}, {pipeline_mode = #tpu.pipeline_mode<synchronous>, transform_indices = @transform_5, window_bounds = array<i64: 1, 3>}, {transform_indices = @transform_6, window_bounds = array<i64: 1, 2, 3>}]} {
    %c0 = arith.constant 0 : index
    %c0_0 = arith.constant 0 : index
    %c0_1 = arith.constant 0 : index
    %c0_2 = arith.constant 0 : index
    %0 = vector.load %arg1[%c0, %c0_0, %c0_1, %c0_2] : memref<1x2x4x70xf32, #tpu.memory_space<vmem>>, vector<1x1x4x70xf32>
    %1 = vector.shape_cast %0 : vector<1x1x4x70xf32> to vector<4x70xf32>
    %2 = vector.extract_strided_slice %1 {offsets = [0, 0], sizes = [4, 64], strides = [1, 1]} : vector<4x70xf32> to vector<4x64xf32>
    %3 = vector.extract_strided_slice %1 {offsets = [0, 1], sizes = [4, 64], strides = [1, 1]} : vector<4x70xf32> to vector<4x64xf32>
    %4 = vector.extract_strided_slice %1 {offsets = [0, 2], sizes = [4, 64], strides = [1, 1]} : vector<4x70xf32> to vector<4x64xf32>
    %5 = vector.extract_strided_slice %1 {offsets = [0, 3], sizes = [4, 64], strides = [1, 1]} : vector<4x70xf32> to vector<4x64xf32>
    %6 = vector.extract_strided_slice %1 {offsets = [0, 4], sizes = [4, 64], strides = [1, 1]} : vector<4x70xf32> to vector<4x64xf32>
    %7 = vector.extract_strided_slice %1 {offsets = [0, 5], sizes = [4, 64], strides = [1, 1]} : vector<4x70xf32> to vector<4x64xf32>
    %8 = vector.extract_strided_slice %1 {offsets = [0, 6], sizes = [4, 64], strides = [1, 1]} : vector<4x70xf32> to vector<4x64xf32>
    %9 = tpu.concatenate %2, %3, %4, %5, %6, %7, %8 in 0 : vector<4x64xf32>, vector<4x64xf32>, vector<4x64xf32>, vector<4x64xf32>, vector<4x64xf32>, vector<4x64xf32>, vector<4x64xf32> -> vector<28x64xf32>
    %c0_3 = arith.constant 0 : index
    %c1 = arith.constant 1 : index
    %c0_4 = arith.constant 0 : index
    %c0_5 = arith.constant 0 : index
    %10 = vector.load %arg1[%c0_3, %c1, %c0_4, %c0_5] : memref<1x2x4x70xf32, #tpu.memory_space<vmem>>, vector<1x1x4x70xf32>
    %11 = vector.shape_cast %10 : vector<1x1x4x70xf32> to vector<4x70xf32>
    %12 = vector.extract_strided_slice %11 {offsets = [0, 0], sizes = [4, 64], strides = [1, 1]} : vector<4x70xf32> to vector<4x64xf32>
    %13 = vector.extract_strided_slice %11 {offsets = [0, 1], sizes = [4, 64], strides = [1, 1]} : vector<4x70xf32> to vector<4x64xf32>
    %14 = vector.extract_strided_slice %11 {offsets = [0, 2], sizes = [4, 64], strides = [1, 1]} : vector<4x70xf32> to vector<4x64xf32>
    %15 = vector.extract_strided_slice %11 {offsets = [0, 3], sizes = [4, 64], strides = [1, 1]} : vector<4x70xf32> to vector<4x64xf32>
    %16 = vector.extract_strided_slice %11 {offsets = [0, 4], sizes = [4, 64], strides = [1, 1]} : vector<4x70xf32> to vector<4x64xf32>
    %17 = vector.extract_strided_slice %11 {offsets = [0, 5], sizes = [4, 64], strides = [1, 1]} : vector<4x70xf32> to vector<4x64xf32>
    %18 = vector.extract_strided_slice %11 {offsets = [0, 6], sizes = [4, 64], strides = [1, 1]} : vector<4x70xf32> to vector<4x64xf32>
    %19 = tpu.concatenate %12, %13, %14, %15, %16, %17, %18 in 0 : vector<4x64xf32>, vector<4x64xf32>, vector<4x64xf32>, vector<4x64xf32>, vector<4x64xf32>, vector<4x64xf32>, vector<4x64xf32> -> vector<28x64xf32>
    %20 = tpu.concatenate %9, %19 in 1 : vector<28x64xf32>, vector<28x64xf32> -> vector<28x128xf32>
    %c0_6 = arith.constant 0 : index
    %c0_7 = arith.constant 0 : index
    %21 = vector.load %arg2[%c0_6, %c0_7] : memref<8x28xf32, #tpu.memory_space<vmem>>, vector<8x28xf32>
    %cst = arith.constant dense<0.000000e+00> : vector<8x128xf32>
    %22 = tpu.matmul %21, %20, %cst {dimension_numbers = #tpu.dot_dimension_numbers<[1], [0], [0], [1], [0, 0, 1, 1], [], []>} : vector<8x28xf32>, vector<28x128xf32>, vector<8x128xf32> -> vector<8x128xf32>
    %c0_8 = arith.constant 0 : index
    %c0_9 = arith.constant 0 : index
    %23 = vector.load %arg3[%c0_8, %c0_9] : memref<8x1xf32, #tpu.memory_space<vmem>>, vector<8x1xf32>
    %24 = vector.broadcast %23 : vector<8x1xf32> to vector<8x128xf32>
    %25 = arith.addf %22, %24 : vector<8x128xf32>
    %26 = arith.mulf %25, %25 : vector<8x128xf32>
    %c0_10 = arith.constant 0 : index
    %c0_11 = arith.constant 0 : index
    %27 = vector.load %arg4[%c0_10, %c0_11] : memref<128x30xf32, #tpu.memory_space<vmem>>, vector<128x30xf32>
    %cst_12 = arith.constant dense<0.000000e+00> : vector<8x30xf32>
    %28 = tpu.matmul %26, %27, %cst_12 {dimension_numbers = #tpu.dot_dimension_numbers<[1], [0], [0], [1], [0, 0, 1, 1], [], []>} : vector<8x128xf32>, vector<128x30xf32>, vector<8x30xf32> -> vector<8x30xf32>
    %cst_13 = arith.constant 9.99999997E-7 : f32
    %29 = vector.broadcast %cst_13 : f32 to vector<8x30xf32>
    %30 = arith.maximumf %28, %29 : vector<8x30xf32>
    %31 = math.log %30 : vector<8x30xf32>
    %32 = vector.extract_strided_slice %31 {offsets = [0, 0], sizes = [1, 15], strides = [1, 1]} : vector<8x30xf32> to vector<1x15xf32>
    %33 = vector.extract_strided_slice %31 {offsets = [1, 0], sizes = [1, 15], strides = [1, 1]} : vector<8x30xf32> to vector<1x15xf32>
    %34 = vector.extract_strided_slice %31 {offsets = [2, 0], sizes = [1, 15], strides = [1, 1]} : vector<8x30xf32> to vector<1x15xf32>
    %35 = vector.extract_strided_slice %31 {offsets = [3, 0], sizes = [1, 15], strides = [1, 1]} : vector<8x30xf32> to vector<1x15xf32>
    %36 = vector.extract_strided_slice %31 {offsets = [4, 0], sizes = [1, 15], strides = [1, 1]} : vector<8x30xf32> to vector<1x15xf32>
    %37 = vector.extract_strided_slice %31 {offsets = [5, 0], sizes = [1, 15], strides = [1, 1]} : vector<8x30xf32> to vector<1x15xf32>
    %38 = vector.extract_strided_slice %31 {offsets = [6, 0], sizes = [1, 15], strides = [1, 1]} : vector<8x30xf32> to vector<1x15xf32>
    %39 = vector.extract_strided_slice %31 {offsets = [7, 0], sizes = [1, 15], strides = [1, 1]} : vector<8x30xf32> to vector<1x15xf32>
    %40 = tpu.concatenate %32, %33, %34, %35, %36, %37, %38, %39 in 1 : vector<1x15xf32>, vector<1x15xf32>, vector<1x15xf32>, vector<1x15xf32>, vector<1x15xf32>, vector<1x15xf32>, vector<1x15xf32>, vector<1x15xf32> -> vector<1x120xf32>
    %41 = vector.extract_strided_slice %31 {offsets = [0, 15], sizes = [1, 15], strides = [1, 1]} : vector<8x30xf32> to vector<1x15xf32>
    %42 = vector.extract_strided_slice %31 {offsets = [1, 15], sizes = [1, 15], strides = [1, 1]} : vector<8x30xf32> to vector<1x15xf32>
    %43 = vector.extract_strided_slice %31 {offsets = [2, 15], sizes = [1, 15], strides = [1, 1]} : vector<8x30xf32> to vector<1x15xf32>
    %44 = vector.extract_strided_slice %31 {offsets = [3, 15], sizes = [1, 15], strides = [1, 1]} : vector<8x30xf32> to vector<1x15xf32>
    %45 = vector.extract_strided_slice %31 {offsets = [4, 15], sizes = [1, 15], strides = [1, 1]} : vector<8x30xf32> to vector<1x15xf32>
    %46 = vector.extract_strided_slice %31 {offsets = [5, 15], sizes = [1, 15], strides = [1, 1]} : vector<8x30xf32> to vector<1x15xf32>
    %47 = vector.extract_strided_slice %31 {offsets = [6, 15], sizes = [1, 15], strides = [1, 1]} : vector<8x30xf32> to vector<1x15xf32>
    %48 = vector.extract_strided_slice %31 {offsets = [7, 15], sizes = [1, 15], strides = [1, 1]} : vector<8x30xf32> to vector<1x15xf32>
    %49 = tpu.concatenate %41, %42, %43, %44, %45, %46, %47, %48 in 1 : vector<1x15xf32>, vector<1x15xf32>, vector<1x15xf32>, vector<1x15xf32>, vector<1x15xf32>, vector<1x15xf32>, vector<1x15xf32>, vector<1x15xf32> -> vector<1x120xf32>
    %50 = tpu.concatenate %40, %49 in 0 : vector<1x120xf32>, vector<1x120xf32> -> vector<2x120xf32>
    %c0_14 = arith.constant 0 : index
    %c0_15 = arith.constant 0 : index
    %51 = vector.load %arg5[%c0_14, %c0_15] : memref<120x3xf32, #tpu.memory_space<vmem>>, vector<120x3xf32>
    %cst_16 = arith.constant dense<0.000000e+00> : vector<2x3xf32>
    %52 = tpu.matmul %50, %51, %cst_16 {dimension_numbers = #tpu.dot_dimension_numbers<[1], [0], [0], [1], [0, 0, 1, 1], [], []>} : vector<2x120xf32>, vector<120x3xf32>, vector<2x3xf32> -> vector<2x3xf32>
    %c0_17 = arith.constant 0 : index
    %c0_18 = arith.constant 0 : index
    %53 = vector.load %arg6[%c0_17, %c0_18] : memref<1x3xf32, #tpu.memory_space<vmem>>, vector<1x3xf32>
    %54 = vector.broadcast %53 : vector<1x3xf32> to vector<2x3xf32>
    %55 = arith.addf %52, %54 : vector<2x3xf32>
    %c0_19 = arith.constant 0 : index
    %c0_20 = arith.constant 0 : index
    %c0_21 = arith.constant 0 : index
    %56 = vector.load %arg7[%c0_19, %c0_20, %c0_21] : memref<1x2x3xf32, #tpu.memory_space<vmem>>, vector<1x2x3xf32>
    %57 = vector.shape_cast %56 : vector<1x2x3xf32> to vector<2x3xf32>
    %58 = vector.shape_cast %55 : vector<2x3xf32> to vector<1x2x3xf32>
    tpu.vector_store %arg7[%c0_19, %c0_20, %c0_21], %58 {strides = array<i32>} : memref<1x2x3xf32, #tpu.memory_space<vmem>>, vector<1x2x3xf32>,
    return
  }
  func.func @transform_0(%arg0: i32) -> (i32, i32, i32, i32) {
    %c0_i32 = arith.constant 0 : i32
    %c0_i32_0 = arith.constant 0 : i32
    %c0_i32_1 = arith.constant 0 : i32
    %c0_i32_2 = arith.constant 0 : i32
    return %arg0, %c0_i32, %c0_i32_0, %c0_i32_1 : i32, i32, i32, i32
  }
  func.func @transform_1(%arg0: i32) -> (i32, i32) {
    %c0_i32 = arith.constant 0 : i32
    %c0_i32_0 = arith.constant 0 : i32
    %c0_i32_1 = arith.constant 0 : i32
    return %c0_i32, %c0_i32_0 : i32, i32
  }
  func.func @transform_2(%arg0: i32) -> (i32, i32) {
    %c0_i32 = arith.constant 0 : i32
    %c0_i32_0 = arith.constant 0 : i32
    %c0_i32_1 = arith.constant 0 : i32
    return %c0_i32, %c0_i32_0 : i32, i32
  }
  func.func @transform_3(%arg0: i32) -> (i32, i32) {
    %c0_i32 = arith.constant 0 : i32
    %c0_i32_0 = arith.constant 0 : i32
    %c0_i32_1 = arith.constant 0 : i32
    return %c0_i32, %c0_i32_0 : i32, i32
  }
  func.func @transform_4(%arg0: i32) -> (i32, i32) {
    %c0_i32 = arith.constant 0 : i32
    %c0_i32_0 = arith.constant 0 : i32
    %c0_i32_1 = arith.constant 0 : i32
    return %c0_i32, %c0_i32_0 : i32, i32
  }
  func.func @transform_5(%arg0: i32) -> (i32, i32) {
    %c0_i32 = arith.constant 0 : i32
    %c0_i32_0 = arith.constant 0 : i32
    %c0_i32_1 = arith.constant 0 : i32
    return %c0_i32, %c0_i32_0 : i32, i32
  }
  func.func @transform_6(%arg0: i32) -> (i32, i32, i32) {
    %c0_i32 = arith.constant 0 : i32
    %c0_i32_0 = arith.constant 0 : i32
    %c0_i32_1 = arith.constant 0 : i32
    return %arg0, %c0_i32, %c0_i32_0 : i32, i32, i32
  }
}

</mosaic_0001>

<llo_original>
// kernel: tpu_custom_call.1
$region0: #{tpu_custom_call.1}
  #allocation0 [shape = 'u32[]', space=smem, size = 0x4, offset = 0x4, fixed_abs, tag = 'smem constant byte address 0x4 - core index']
  #allocation1 [shape = 'u32[144,128]{1,0:T(1,128)}', space=vmem, size = 0x12000, scoped, tag = 'internal scratch']
  %s0 = inlined_call_operand.vmem [shape: f32[1,2,4,70], index: 0, kind: input, shape index: {}]
  %s1 = inlined_call_operand.vmem [shape: f32[8,28], index: 1, kind: input, shape index: {}]
  %s2 = inlined_call_operand.vmem [shape: f32[8,1], index: 2, kind: input, shape index: {}]
  %s3 = inlined_call_operand.vmem [shape: f32[128,30], index: 3, kind: input, shape index: {}]
  %s4 = inlined_call_operand.vmem [shape: f32[120,3], index: 4, kind: input, shape index: {}]
  %s5 = inlined_call_operand.vmem [shape: f32[1,3], index: 5, kind: input, shape index: {}]
  %s6 = inlined_call_operand.hbm [shape: f32[1,2,3], index: 6, kind: output, shape index: {}]
  %s7 = sld [smem:[#allocation0]]
  $region34: #{tpu_custom_call.1} parent=0
    _
  %s9 = ssub.s32 1, %s7
  %s10 = scalar_select 0, %s9, %s7
  $region1: #{tpu_custom_call.1} parent=0
    #allocation2 [shape = 'u8[1024]{0}', space=vmem, size = 0x400, scoped, tag = 'output window, operand 0, single buffered']
    #allocation3 [shape = 's32[1]{0}', space=sflag, size = 0x4, scoped, tag = 'scoped memory for tpu_custom_call.1']
    %11 = vsyncpa [#allocation3], 0
    // Predicated region
    $region2: #{tpu_custom_call.1} parent=1 // pred_check
      _
    $region3: #{tpu_custom_call.1} parent=1 // pred_check_branch
      %13 = sbr.rel (0) target = $region5
    $region4: #{tpu_custom_call.1} parent=1 // pred_region
      _
    $region5: #{tpu_custom_call.1} parent=1 // pred_fallthru
      _
    // Predicated region
    $region6: #{tpu_custom_call.1} parent=1 // pred_check
      _
    $region7: #{tpu_custom_call.1} parent=1 // pred_check_branch
      %15 = sbr.rel (0) target = $region9
    $region8: #{tpu_custom_call.1} parent=1 // pred_region
      _
    $region9: #{tpu_custom_call.1} parent=1 // pred_fallthru
      _
    // Predicated region
    $region10: #{tpu_custom_call.1} parent=1 // pred_check
      _
    $region11: #{tpu_custom_call.1} parent=1 // pred_check_branch
      %17 = sbr.rel (0) target = $region13
    $region12: #{tpu_custom_call.1} parent=1 // pred_region
      _
    $region13: #{tpu_custom_call.1} parent=1 // pred_fallthru
      _
    // Predicated region
    $region14: #{tpu_custom_call.1} parent=1 // pred_check
      _
    $region15: #{tpu_custom_call.1} parent=1 // pred_check_branch
      %19 = sbr.rel (0) target = $region17
    $region16: #{tpu_custom_call.1} parent=1 // pred_region
      _
    $region17: #{tpu_custom_call.1} parent=1 // pred_fallthru
      _
    // Predicated region
    $region18: #{tpu_custom_call.1} parent=1 // pred_check
      _
    $region19: #{tpu_custom_call.1} parent=1 // pred_check_branch
      %21 = sbr.rel (0) target = $region21
    $region20: #{tpu_custom_call.1} parent=1 // pred_region
      _
    $region21: #{tpu_custom_call.1} parent=1 // pred_fallthru
      _
    // Predicated region
    $region22: #{tpu_custom_call.1} parent=1 // pred_check
      _
    $region23: #{tpu_custom_call.1} parent=1 // pred_check_branch
      %23 = sbr.rel (0) target = $region25
    $region24: #{tpu_custom_call.1} parent=1 // pred_region
      _
    $region25: #{tpu_custom_call.1} parent=1 // pred_fallthru
      _
    %v24 = vld [vmem:[%s0] sm:$0xf]
    %v26 = vrot.slane %v24, 4
    %27 = vrot.lane.b32.xlu0 %v26, 127
    %v28 = vpop.permute.xlu0 %27
    %30 = vrot.lane.b32.xlu0 %v24, 126
    %v31 = vpop.permute.xlu0 %30
    %33 = vrot.lane.b32.xlu0 %v26, 125
    %v34 = vpop.permute.xlu0 %33
    %36 = vrot.lane.b32.xlu0 %v24, 124
    %v37 = vpop.permute.xlu0 %36
    %39 = vrot.lane.b32.xlu0 %v26, 123
    %v40 = vpop.permute.xlu0 %39
    %42 = vrot.lane.b32.xlu0 %v24, 122
    %v43 = vpop.permute.xlu0 %42
    %vm45 = vcmask 1043456
    %v46 = vsel %vm45, %v24, %v28
    %v47 = vsel %vm45, %v31, %v34
    %v48 = vsel %vm45, %v37, %v40
    %s49 = scalar_lea.vmem %s0, 4
    %v50 = vld [vmem:[%s49] sm:$0xf]
    %v52 = vrot.slane %v50, 4
    %53 = vrot.lane.b32.xlu0 %v52, 127
    %v54 = vpop.permute.xlu0 %53
    %56 = vrot.lane.b32.xlu0 %v50, 126
    %v57 = vpop.permute.xlu0 %56
    %59 = vrot.lane.b32.xlu0 %v52, 125
    %v60 = vpop.permute.xlu0 %59
    %62 = vrot.lane.b32.xlu0 %v50, 124
    %v63 = vpop.permute.xlu0 %62
    %65 = vrot.lane.b32.xlu0 %v52, 123
    %v66 = vpop.permute.xlu0 %65
    %68 = vrot.lane.b32.xlu0 %v50, 122
    %v69 = vpop.permute.xlu0 %68
    %v70 = vsel %vm45, %v50, %v54
    %v71 = vsel %vm45, %v57, %v60
    %v72 = vsel %vm45, %v63, %v66
    %76 = vrot.lane.b32.xlu0 %v70, 64
    %v77 = vpop.permute.xlu0 %76
    %78 = vrot.lane.b32.xlu0 %v71, 64
    %v79 = vpop.permute.xlu0 %78
    %80 = vrot.lane.b32.xlu0 %v72, 64
    %v81 = vpop.permute.xlu0 %80
    %82 = vrot.lane.b32.xlu0 %v69, 64
    %v83 = vpop.permute.xlu0 %82
    %vm88 = vcmask 523264
    %v89 = vsel %vm88, %v46, %v77
    %v90 = vsel %vm88, %v47, %v79
    %v91 = vsel %vm88, %v48, %v81
    %v92 = vsel %vm88, %v43, %v83
    %v93 = vld [vmem:[%s1] sm:$0xff]
    %v94 = vld [vmem:[%s2] sm:$0xff]
    %96 = vset.pattern.permute.xlu0 0
    %97 = vperm.xlu0 %96, %v94
    %v98 = vpop.permute.xlu0 %97
    %vm100 = vcmask 228352
    %v102 = vsel %vm100, %v93, 0
    %v105 = vsel %vm45, %v92, 0
    %107 = vmatprep.subr.mxu0 0.0
    %108 = vmatpush1.msra.mxu0 %v89
    %109 = vmatprep.subr.mxu0 0.0
    %110 = vmatpush1.msra.mxu0 %v90
    %111 = vmatprep.subr.mxu0 0.0
    %112 = vmatpush1.msra.mxu0 %v91
    %113 = vmatprep.subr.mxu0 0.0
    %114 = vmatpush1.msra.mxu0 %v105
    %115 = vmatprep.subr.mxu0 0.0
    %116 = vmatpush1.msra.mxu0 0.0
    %117 = vmatprep.subr.mxu0 0.0
    %118 = vmatpush1.msra.mxu0 0.0
    %119 = vmatprep.subr.mxu0 0.0
    %120 = vmatpush1.msra.mxu0 0.0
    %121 = vmatprep.subr.mxu0 0.0
    %122 = vmatpush1.msra.mxu0 0.0
    %123 = vmatprep.subr.mxu0 0.0
    %124 = vmatpush1.msra.mxu0 0.0
    %125 = vmatprep.subr.mxu0 0.0
    %126 = vmatpush1.msra.mxu0 0.0
    %127 = vmatprep.subr.mxu0 0.0
    %128 = vmatpush1.msra.mxu0 0.0
    %129 = vmatprep.subr.mxu0 0.0
    %130 = vmatpush1.msra.mxu0 0.0
    %131 = vmatprep.subr.mxu0 0.0
    %132 = vmatpush1.msra.mxu0 0.0
    %133 = vmatprep.subr.mxu0 0.0
    %134 = vmatpush1.msra.mxu0 0.0
    %135 = vmatprep.subr.mxu0 0.0
    %136 = vmatpush1.msra.mxu0 0.0
    %137 = vmatprep.subr.mxu0 0.0
    %138 = vmatpush1.msra.mxu0 0.0
    %139 = vmatprep.subr.mxu0 0.0
    %140 = vmatpush1.msra.mxu0 0.0
    %141 = vmatprep.subr.mxu0 0.0
    %142 = vmatpush1.msra.mxu0 0.0
    %143 = vmatprep.subr.mxu0 0.0
    %144 = vmatpush1.msra.mxu0 0.0
    %145 = vmatprep.subr.mxu0 0.0
    %146 = vmatpush1.msra.mxu0 0.0
    %147 = vmatprep.subr.mxu0 0.0
    %148 = vmatpush1.msra.mxu0 0.0
    %149 = vmatprep.subr.mxu0 0.0
    %150 = vmatpush1.msra.mxu0 0.0
    %151 = vmatprep.subr.mxu0 0.0
    %152 = vmatpush1.msra.mxu0 0.0
    %153 = vmatprep.subr.mxu0 0.0
    %154 = vmatpush1.msra.mxu0 0.0
    %155 = vmatprep.subr.mxu0 0.0
    %156 = vmatpush1.msra.mxu0 0.0
    %157 = vmatprep.subr.mxu0 0.0
    %158 = vmatpush1.msra.mxu0 0.0
    %159 = vmatprep.subr.mxu0 0.0
    %160 = vmatpush1.msra.mxu0 0.0
    %161 = vmatprep.subr.mxu0 0.0
    %162 = vmatpush1.msra.mxu0 0.0
    %163 = vmatprep.subr.mxu0 0.0
    %164 = vmatpush1.msra.mxu0 0.0
    %165 = vmatprep.subr.mxu0 0.0
    %166 = vmatpush1.msra.mxu0 0.0
    %167 = vmatprep.subr.mxu0 0.0
    %168 = vmatpush1.msra.mxu0 0.0
    %169 = vmatprep.subr.mxu0 0.0
    %170 = vmatpush1.msra.mxu0 0.0
    %171 = vmatprep.mubr.f32.mxu0 0.0
    %172 = vmatmul.mubr.f32.gmra.mrb[0].mxu0 %v102
    %v173 = vpop.f32.mrb[0].mxu0
    %v174 = vadd.f32 %v98, %v173
    %v175 = vpop.f32.mrb[0].mxu0
    %176 = vdwg.mxu0
    %v177 = vmul.f32 %v174, %v174
    %v178 = vld [vmem:[%s3] sm:$0xff]
    %v179 = vld [vmem:[%s3 + $0x8] sm:$0xff]
    %v180 = vld [vmem:[%s3 + $0x10] sm:$0xff]
    %v181 = vld [vmem:[%s3 + $0x18] sm:$0xff]
    %v182 = vld [vmem:[%s3 + $0x20] sm:$0xff]
    %v183 = vld [vmem:[%s3 + $0x28] sm:$0xff]
    %v184 = vld [vmem:[%s3 + $0x30] sm:$0xff]
    %v185 = vld [vmem:[%s3 + $0x38] sm:$0xff]
    %v186 = vld [vmem:[%s3 + $0x40] sm:$0xff]
    %v187 = vld [vmem:[%s3 + $0x48] sm:$0xff]
    %v188 = vld [vmem:[%s3 + $0x50] sm:$0xff]
    %v189 = vld [vmem:[%s3 + $0x58] sm:$0xff]
    %v190 = vld [vmem:[%s3 + $0x60] sm:$0xff]
    %v191 = vld [vmem:[%s3 + $0x68] sm:$0xff]
    %v192 = vld [vmem:[%s3 + $0x70] sm:$0xff]
    %v193 = vld [vmem:[%s3 + $0x78] sm:$0xff]
    %194 = vmatprep.subr.mxu0 0.0
    %195 = vmatpush1.msra.mxu0 %v178
    %196 = vmatprep.subr.mxu0 0.0
    %197 = vmatpush1.msra.mxu0 %v179
    %198 = vmatprep.subr.mxu0 0.0
    %199 = vmatpush1.msra.mxu0 %v180
    %200 = vmatprep.subr.mxu0 0.0
    %201 = vmatpush1.msra.mxu0 %v181
    %202 = vmatprep.subr.mxu0 0.0
    %203 = vmatpush1.msra.mxu0 %v182
    %204 = vmatprep.subr.mxu0 0.0
    %205 = vmatpush1.msra.mxu0 %v183
    %206 = vmatprep.subr.mxu0 0.0
    %207 = vmatpush1.msra.mxu0 %v184
    %208 = vmatprep.subr.mxu0 0.0
    %209 = vmatpush1.msra.mxu0 %v185
    %210 = vmatprep.subr.mxu0 0.0
    %211 = vmatpush1.msra.mxu0 %v186
    %212 = vmatprep.subr.mxu0 0.0
    %213 = vmatpush1.msra.mxu0 %v187
    %214 = vmatprep.subr.mxu0 0.0
    %215 = vmatpush1.msra.mxu0 %v188
    %216 = vmatprep.subr.mxu0 0.0
    %217 = vmatpush1.msra.mxu0 %v189
    %218 = vmatprep.subr.mxu0 0.0
    %219 = vmatpush1.msra.mxu0 %v190
    %220 = vmatprep.subr.mxu0 0.0
    %221 = vmatpush1.msra.mxu0 %v191
    %222 = vmatprep.subr.mxu0 0.0
    %223 = vmatpush1.msra.mxu0 %v192
    %224 = vmatprep.subr.mxu0 0.0
    %225 = vmatpush1.msra.mxu0 %v193
    %226 = vmatprep.subr.mxu0 0.0
    %227 = vmatpush1.msra.mxu0 0.0
    %228 = vmatprep.subr.mxu0 0.0
    %229 = vmatpush1.msra.mxu0 0.0
    %230 = vmatprep.subr.mxu0 0.0
    %231 = vmatpush1.msra.mxu0 0.0
    %232 = vmatprep.subr.mxu0 0.0
    %233 = vmatpush1.msra.mxu0 0.0
    %234 = vmatprep.subr.mxu0 0.0
    %235 = vmatpush1.msra.mxu0 0.0
    %236 = vmatprep.subr.mxu0 0.0
    %237 = vmatpush1.msra.mxu0 0.0
    %238 = vmatprep.subr.mxu0 0.0
    %239 = vmatpush1.msra.mxu0 0.0
    %240 = vmatprep.subr.mxu0 0.0
    %241 = vmatpush1.msra.mxu0 0.0
    %242 = vmatprep.subr.mxu0 0.0
    %243 = vmatpush1.msra.mxu0 0.0
    %244 = vmatprep.subr.mxu0 0.0
    %245 = vmatpush1.msra.mxu0 0.0
    %246 = vmatprep.subr.mxu0 0.0
    %247 = vmatpush1.msra.mxu0 0.0
    %248 = vmatprep.subr.mxu0 0.0
    %249 = vmatpush1.msra.mxu0 0.0
    %250 = vmatprep.subr.mxu0 0.0
    %251 = vmatpush1.msra.mxu0 0.0
    %252 = vmatprep.subr.mxu0 0.0
    %253 = vmatpush1.msra.mxu0 0.0
    %254 = vmatprep.subr.mxu0 0.0
    %255 = vmatpush1.msra.mxu0 0.0
    %256 = vmatprep.subr.mxu0 0.0
    %257 = vmatpush1.msra.mxu0 0.0
    %258 = vmatprep.mubr.f32.mxu0 0.0
    %259 = vmatmul.mubr.f32.gmra.mrb[0].mxu0 %v177
    %v260 = vpop.f32.mrb[0].mxu0
    %v261 = vadd.f32 0.0, %v260
    %v262 = vpop.f32.mrb[0].mxu0
    %263 = vdwg.mxu0
    %v264 = vmax.f32 %v261, 1e-06
    %v265 = vlog2.pop %v264
    %v266 = vmul.f32 %v265, 0.6931472
    %v268 = vrot.slane %v266, 1
    %269 = vrot.lane.b32.xlu0 %v268, 15
    %v270 = vpop.permute.xlu0 %269
    %v272 = vrot.slane %v266, 2
    %273 = vrot.lane.b32.xlu0 %v272, 30
    %v274 = vpop.permute.xlu0 %273
    %v276 = vrot.slane %v266, 3
    %277 = vrot.lane.b32.xlu0 %v276, 45
    %v278 = vpop.permute.xlu0 %277
    %v280 = vrot.slane %v266, 4
    %281 = vrot.lane.b32.xlu0 %v280, 60
    %v282 = vpop.permute.xlu0 %281
    %v284 = vrot.slane %v266, 5
    %285 = vrot.lane.b32.xlu0 %v284, 75
    %v286 = vpop.permute.xlu0 %285
    %v288 = vrot.slane %v266, 6
    %289 = vrot.lane.b32.xlu0 %v288, 90
    %v290 = vpop.permute.xlu0 %289
    %v292 = vrot.slane %v266, 7
    %293 = vrot.lane.b32.xlu0 %v292, 105
    %v294 = vpop.permute.xlu0 %293
    %vm296 = vcmask 121856
    %v297 = vsel %vm296, %v266, %v270
    %vm298 = vcmask 244736
    %v299 = vsel %vm298, %v297, %v274
    %vm300 = vcmask 367616
    %v301 = vsel %vm300, %v299, %v278
    %vm302 = vcmask 490496
    %v303 = vsel %vm302, %v301, %v282
    %vm304 = vcmask 613376
    %v305 = vsel %vm304, %v303, %v286
    %vm306 = vcmask 736256
    %v307 = vsel %vm306, %v305, %v290
    %vm308 = vcmask 859136
    %v309 = vsel %vm308, %v307, %v294
    %310 = vrot.lane.b32.xlu0 %v266, 113
    %v311 = vpop.permute.xlu0 %310
    %314 = vrot.lane.b32.xlu0 %v272, 15
    %v315 = vpop.permute.xlu0 %314
    %317 = vrot.lane.b32.xlu0 %v276, 30
    %v318 = vpop.permute.xlu0 %317
    %320 = vrot.lane.b32.xlu0 %v280, 45
    %v321 = vpop.permute.xlu0 %320
    %323 = vrot.lane.b32.xlu0 %v284, 60
    %v324 = vpop.permute.xlu0 %323
    %326 = vrot.lane.b32.xlu0 %v288, 75
    %v327 = vpop.permute.xlu0 %326
    %329 = vrot.lane.b32.xlu0 %v292, 90
    %v330 = vpop.permute.xlu0 %329
    %v332 = vsel %vm296, %v311, %v268
    %v333 = vsel %vm298, %v332, %v315
    %v334 = vsel %vm300, %v333, %v318
    %v335 = vsel %vm302, %v334, %v321
    %v336 = vsel %vm304, %v335, %v324
    %v337 = vsel %vm306, %v336, %v327
    %v338 = vsel %vm308, %v337, %v330
    %v340 = vrot.slane %v338, 7
    %vm342 = vcmask 1040384
    %v343 = vsel %vm342, %v309, %v340
    %v344 = vld [vmem:[%s4] sm:$0xff]
    %v345 = vld [vmem:[%s4 + $0x8] sm:$0xff]
    %v346 = vld [vmem:[%s4 + $0x10] sm:$0xff]
    %v347 = vld [vmem:[%s4 + $0x18] sm:$0xff]
    %v348 = vld [vmem:[%s4 + $0x20] sm:$0xff]
    %v349 = vld [vmem:[%s4 + $0x28] sm:$0xff]
    %v350 = vld [vmem:[%s4 + $0x30] sm:$0xff]
    %v351 = vld [vmem:[%s4 + $0x38] sm:$0xff]
    %v352 = vld [vmem:[%s4 + $0x40] sm:$0xff]
    %v353 = vld [vmem:[%s4 + $0x48] sm:$0xff]
    %v354 = vld [vmem:[%s4 + $0x50] sm:$0xff]
    %v355 = vld [vmem:[%s4 + $0x58] sm:$0xff]
    %v356 = vld [vmem:[%s4 + $0x60] sm:$0xff]
    %v357 = vld [vmem:[%s4 + $0x68] sm:$0xff]
    %v358 = vld [vmem:[%s4 + $0x70] sm:$0xff]
    %v359 = vld [vmem:[%s5] sm:$0x1]
    %v361 = vlaneseq
    %v362 = vshrl.u32 %v361, 7
    %v363 = vsub.s32 0, %v362
    %v364 = vrot.slane %v359, %v363
    %vm366 = vcmask 982016
    %v368 = vsel %vm366, %v343, 0
    %370 = vmatprep.subr.mxu0 0.0
    %371 = vmatpush1.msra.mxu0 %v344
    %372 = vmatprep.subr.mxu0 0.0
    %373 = vmatpush1.msra.mxu0 %v345
    %374 = vmatprep.subr.mxu0 0.0
    %375 = vmatpush1.msra.mxu0 %v346
    %376 = vmatprep.subr.mxu0 0.0
    %377 = vmatpush1.msra.mxu0 %v347
    %378 = vmatprep.subr.mxu0 0.0
    %379 = vmatpush1.msra.mxu0 %v348
    %380 = vmatprep.subr.mxu0 0.0
    %381 = vmatpush1.msra.mxu0 %v349
    %382 = vmatprep.subr.mxu0 0.0
    %383 = vmatpush1.msra.mxu0 %v350
    %384 = vmatprep.subr.mxu0 0.0
    %385 = vmatpush1.msra.mxu0 %v351
    %386 = vmatprep.subr.mxu0 0.0
    %387 = vmatpush1.msra.mxu0 %v352
    %388 = vmatprep.subr.mxu0 0.0
    %389 = vmatpush1.msra.mxu0 %v353
    %390 = vmatprep.subr.mxu0 0.0
    %391 = vmatpush1.msra.mxu0 %v354
    %392 = vmatprep.subr.mxu0 0.0
    %393 = vmatpush1.msra.mxu0 %v355
    %394 = vmatprep.subr.mxu0 0.0
    %395 = vmatpush1.msra.mxu0 %v356
    %396 = vmatprep.subr.mxu0 0.0
    %397 = vmatpush1.msra.mxu0 %v357
    %398 = vmatprep.subr.mxu0 0.0
    %399 = vmatpush1.msra.mxu0 %v358
    %400 = vmatprep.subr.mxu0 0.0
    %401 = vmatpush1.msra.mxu0 0.0
    %402 = vmatprep.subr.mxu0 0.0
    %403 = vmatpush1.msra.mxu0 0.0
    %404 = vmatprep.subr.mxu0 0.0
    %405 = vmatpush1.msra.mxu0 0.0
    %406 = vmatprep.subr.mxu0 0.0
    %407 = vmatpush1.msra.mxu0 0.0
    %408 = vmatprep.subr.mxu0 0.0
    %409 = vmatpush1.msra.mxu0 0.0
    %410 = vmatprep.subr.mxu0 0.0
    %411 = vmatpush1.msra.mxu0 0.0
    %412 = vmatprep.subr.mxu0 0.0
    %413 = vmatpush1.msra.mxu0 0.0
    %414 = vmatprep.subr.mxu0 0.0
    %415 = vmatpush1.msra.mxu0 0.0
    %416 = vmatprep.subr.mxu0 0.0
    %417 = vmatpush1.msra.mxu0 0.0
    %418 = vmatprep.subr.mxu0 0.0
    %419 = vmatpush1.msra.mxu0 0.0
    %420 = vmatprep.subr.mxu0 0.0
    %421 = vmatpush1.msra.mxu0 0.0
    %422 = vmatprep.subr.mxu0 0.0
    %423 = vmatpush1.msra.mxu0 0.0
    %424 = vmatprep.subr.mxu0 0.0
    %425 = vmatpush1.msra.mxu0 0.0
    %426 = vmatprep.subr.mxu0 0.0
    %427 = vmatpush1.msra.mxu0 0.0
    %428 = vmatprep.subr.mxu0 0.0
    %429 = vmatpush1.msra.mxu0 0.0
    %430 = vmatprep.subr.mxu0 0.0
    %431 = vmatpush1.msra.mxu0 0.0
    %432 = vmatprep.subr.mxu0 0.0
    %433 = vmatpush1.msra.mxu0 0.0
    %434 = vmatprep.mubr.f32.mxu0 0.0
    %435 = vmatmul.mubr.f32.gmra.mrb[0].mxu0 %v368
    %v436 = vpop.f32.mrb[0].mxu0
    %v437 = vadd.f32 %v364, %v436
    %v438 = vpop.f32.mrb[0].mxu0
    %439 = vdwg.mxu0
    %vm440 = vcmask 17408
    %441 = vst.msk [vmem:[#allocation2] sm:$0x3] %vm440, %v437
    // Predicated region
    $region26: #{tpu_custom_call.1} parent=1 // pred_check
      _
    $region27: #{tpu_custom_call.1} parent=1 // pred_check_branch
      %443 = sbr.rel (0) target = $region29
    $region28: #{tpu_custom_call.1} parent=1 // pred_region
      %s445 = ssub.s32 32, 32
      %446 = vsyncadd [#allocation3], %s445
      %s448 = sshll.u32 [#allocation2], 4
      %s449 = int_to_ptr.vmem [resolvable:$true] %s448
      %451 = dma.vmem_to_hbm [thread:$0]  %s449, 32, %s6, [#allocation3]
    $region29: #{tpu_custom_call.1} parent=1 // pred_fallthru
      _
    // Predicated region
    $region30: #{tpu_custom_call.1} parent=1 // pred_check
      _
    $region31: #{tpu_custom_call.1} parent=1 // pred_check_branch
      %453 = sbr.rel (0) target = $region33
    $region32: #{tpu_custom_call.1} parent=1 // pred_region
      %454 = dma.done [#allocation3], 32
    $region33: #{tpu_custom_call.1} parent=1 // pred_fallthru
      _
    %455 = vsyncpa [#allocation3], 1

</llo_original>
